<compile_context>
chip_gen: v6e
topology: v6e:2x2x1
jax: 0.10.0
libtpu: 0.0.40
codegen_flags: <defaults>
</compile_context>

<pallas_src>
import functools
import math

import jax
import jax.numpy as jnp
from jax import lax
from jax.experimental import pallas as pl
from jax.experimental.pallas import tpu as pltpu

LANES = 128
MAX_TILE_ROWS = 1024   # (1024,128) f32 block = 512 KiB; 3 streams x 2 bufs + acc ~= 3.6 MiB VMEM
NUM_CORES = 2          # megacore split on v7x; harmless (sequential) on v5e/v6e


def _bce_elem(x, y):
    # Numerically-stable BCE with logits, matches
    # F.binary_cross_entropy_with_logits elementwise formula:
    #   max(x, 0) - x*y + log(1 + exp(-|x|))
    return jnp.maximum(x, 0.0) - x * y + jnp.log1p(jnp.exp(-jnp.abs(x)))


def _aux_loss_kernel(main_ref, aux_ref, tgt_ref, out_ref, acc_ref, *,
                     aux_weight, blocks_per_core, last_blk, tail_valid,
                     tile_rows):
    p = pl.program_id(0)          # core / parallel axis
    j = pl.program_id(1)          # reduction (arbitrary) axis
    gblk = p * blocks_per_core + j  # global row-block index

    @pl.when(j == 0)
    def _():
        acc_ref[...] = jnp.zeros_like(acc_ref)

    x = main_ref[...].astype(jnp.float32)
    a = aux_ref[...].astype(jnp.float32)
    y = tgt_ref[...].astype(jnp.float32)

    # Fused per-element contribution: bce(main) + w * bce(aux).
    contrib = _bce_elem(x, y) + jnp.float32(aux_weight) * _bce_elem(a, y)

    # Blocks strictly before the last data block: no masking needed.
    @pl.when(gblk < last_blk)
    def _():
        acc_ref[...] += contrib

    # Last data block: mask the zero-padded tail (BCE(0,0) = log 2 != 0).
    @pl.when(gblk == last_blk)
    def _():
        row = lax.broadcasted_iota(jnp.int32, (tile_rows, LANES), 0)
        col = lax.broadcasted_iota(jnp.int32, (tile_rows, LANES), 1)
        mask = (row * LANES + col) < tail_valid
        acc_ref[...] += jnp.where(mask, contrib, jnp.float32(0.0))
    # Blocks after last_blk are pure padding -> skipped entirely.

    @pl.when(j == pl.num_programs(1) - 1)
    def _():
        # Fold (tile_rows, 128) accumulator along sublane-groups -> (8, 128).
        # (Splitting the leading dim by 8 matches the native (8,128) tiling.)
        out_ref[...] = acc_ref[...].reshape(tile_rows // 8, 8, LANES).sum(axis=0)


def _cdiv(a, b):
    return (a + b - 1) // b


def _round_up(a, b):
    return _cdiv(a, b) * b


def aux_loss(outputs, targets, aux_weight=0.4):
    """outputs: (main_logits, aux_logits), each same shape as targets (e.g. NCHW)."""
    main_logits, aux_logits = outputs[0], outputs[1]
    assert main_logits.shape == targets.shape
    assert aux_logits.shape == targets.shape

    n = math.prod(targets.shape)
    rows = _cdiv(n, LANES)
    tile_rows = min(MAX_TILE_ROWS, _round_up(rows, 8))
    total_blocks = _round_up(_cdiv(rows, tile_rows), NUM_CORES)
    blocks_per_core = total_blocks // NUM_CORES
    rows_p = total_blocks * tile_rows

    blk_elems = tile_rows * LANES
    last_blk = (n - 1) // blk_elems          # last block containing real data
    tail_valid = n - last_blk * blk_elems    # valid elements inside that block

    def prep(x):
        # Keep native dtype (no wrapper upcast); cast to f32 inside the kernel.
        flat = jnp.ravel(x)
        pad = rows_p * LANES - n
        if pad:
            flat = jnp.pad(flat, (0, pad))
        return flat.reshape(rows_p, LANES)

    in_spec = pl.BlockSpec((tile_rows, LANES),
                           lambda p, j: (p * blocks_per_core + j, 0))

    kernel = functools.partial(
        _aux_loss_kernel,
        aux_weight=float(aux_weight),
        blocks_per_core=blocks_per_core,
        last_blk=last_blk,
        tail_valid=tail_valid,
        tile_rows=tile_rows,
    )

    partials = pl.pallas_call(
        kernel,
        out_shape=jax.ShapeDtypeStruct((NUM_CORES * 8, LANES), jnp.float32),
        grid_spec=pltpu.PrefetchScalarGridSpec(
            num_scalar_prefetch=0,
            grid=(NUM_CORES, blocks_per_core),
            in_specs=[in_spec, in_spec, in_spec],
            out_specs=pl.BlockSpec((8, LANES), lambda p, j: (p, 0)),
            scratch_shapes=[pltpu.VMEM((tile_rows, LANES), jnp.float32)],
        ),
        compiler_params=pltpu.CompilerParams(
            dimension_semantics=("parallel", "arbitrary")),
    )(prep(main_logits), prep(aux_logits), prep(targets))

    # Tiny final reduction of the per-core (8,128) partial slabs.
    return jnp.sum(partials) * (1.0 / float(n))


def _reference(outputs, targets, aux_weight=0.4):
    def bce_mean(x, y):
        x = x.astype(jnp.float32)
        y = y.astype(jnp.float32)
        return jnp.mean(_bce_elem(x, y))
    return bce_mean(outputs[0], targets) + aux_weight * bce_mean(outputs[1], targets)


if __name__ == "__main__":
    key = jax.random.PRNGKey(0)
    k1, k2, k3 = jax.random.split(key, 3)

    B, C, H, W = 2, 4, 16, 16  # NCHW, consistent with a segmentation-style aux loss
    main_logits = jax.random.normal(k1, (B, C, H, W), jnp.float32)
    aux_logits = jax.random.normal(k2, (B, C, H, W), jnp.float32)
    targets = (jax.random.uniform(k3, (B, C, H, W)) > 0.5).astype(jnp.float32)

    loss = aux_loss((main_logits, aux_logits), targets, aux_weight=0.4)
    loss = jax.block_until_ready(loss)

    ref = _reference((main_logits, aux_logits), targets, aux_weight=0.4)
    ref = jax.block_until_ready(ref)

    assert jnp.allclose(loss, ref, rtol=1e-5, atol=1e-5), (loss, ref)
    print("KERNEL_OK")
</pallas_src>

<mosaic_0001>
module attributes {stable_mosaic.version = 11 : i64} {
  func.func @_aux_loss_kernel(%arg0: i32, %arg1: i32, %arg2: memref<16x128xf32, #tpu.memory_space<vmem>>, %arg3: memref<16x128xf32, #tpu.memory_space<vmem>>, %arg4: memref<16x128xf32, #tpu.memory_space<vmem>>, %arg5: memref<8x128xf32, #tpu.memory_space<vmem>>, %arg6: memref<16x128xf32, #tpu.memory_space<vmem>>) attributes {dimension_semantics = [#tpu.dimension_semantics<parallel>, #tpu.dimension_semantics<arbitrary>], iteration_bounds = array<i64: 2, 1>, scalar_prefetch = 0 : i64, scratch_operands = 1 : i64, tpu.core_type = #tpu.core_type<tc>, window_params = [{transform_indices = @transform_0, window_bounds = array<i64: 16, 128>}, {transform_indices = @transform_1, window_bounds = array<i64: 16, 128>}, {transform_indices = @transform_2, window_bounds = array<i64: 16, 128>}, {transform_indices = @transform_3, window_bounds = array<i64: 8, 128>}]} {
    %c1_i32 = arith.constant 1 : i32
    %0 = arith.muli %arg0, %c1_i32 : i32
    %1 = arith.addi %0, %arg1 : i32
    %c0_i32 = arith.constant 0 : i32
    %2 = arith.cmpi eq, %arg1, %c0_i32 : i32
    %3 = arith.extui %2 : i1 to i32
    %c0_i32_0 = arith.constant 0 : i32
    %4 = arith.cmpi ne, %3, %c0_i32_0 : i32
    scf.if %4 {
      %cst_16 = arith.constant 0.000000e+00 : f32
      %40 = vector.broadcast %cst_16 : f32 to vector<16x128xf32>
      %c0_17 = arith.constant 0 : index
      %c0_18 = arith.constant 0 : index
      %41 = vector.load %arg6[%c0_17, %c0_18] : memref<16x128xf32, #tpu.memory_space<vmem>>, vector<16x128xf32>
      tpu.vector_store %arg6[%c0_17, %c0_18], %40 {strides = array<i32>} : memref<16x128xf32, #tpu.memory_space<vmem>>, vector<16x128xf32>,
    } else {
    }
    %c0 = arith.constant 0 : index
    %c0_1 = arith.constant 0 : index
    %5 = vector.load %arg2[%c0, %c0_1] : memref<16x128xf32, #tpu.memory_space<vmem>>, vector<16x128xf32>
    %c0_2 = arith.constant 0 : index
    %c0_3 = arith.constant 0 : index
    %6 = vector.load %arg3[%c0_2, %c0_3] : memref<16x128xf32, #tpu.memory_space<vmem>>, vector<16x128xf32>
    %c0_4 = arith.constant 0 : index
    %c0_5 = arith.constant 0 : index
    %7 = vector.load %arg4[%c0_4, %c0_5] : memref<16x128xf32, #tpu.memory_space<vmem>>, vector<16x128xf32>
    %cst = arith.constant 0.000000e+00 : f32
    %8 = vector.broadcast %cst : f32 to vector<16x128xf32>
    %9 = arith.maximumf %5, %8 : vector<16x128xf32>
    %10 = arith.mulf %5, %7 : vector<16x128xf32>
    %11 = arith.subf %9, %10 : vector<16x128xf32>
    %12 = math.absf %5 : vector<16x128xf32>
    %cst_6 = arith.constant 0.000000e+00 : f32
    %13 = vector.broadcast %cst_6 : f32 to vector<16x128xf32>
    %14 = arith.subf %13, %12 : vector<16x128xf32>
    %15 = math.exp %14 : vector<16x128xf32>
    %16 = math.log1p %15 : vector<16x128xf32>
    %17 = arith.addf %11, %16 : vector<16x128xf32>
    %cst_7 = arith.constant 0.000000e+00 : f32
    %18 = vector.broadcast %cst_7 : f32 to vector<16x128xf32>
    %19 = arith.maximumf %6, %18 : vector<16x128xf32>
    %20 = arith.mulf %6, %7 : vector<16x128xf32>
    %21 = arith.subf %19, %20 : vector<16x128xf32>
    %22 = math.absf %6 : vector<16x128xf32>
    %cst_8 = arith.constant 0.000000e+00 : f32
    %23 = vector.broadcast %cst_8 : f32 to vector<16x128xf32>
    %24 = arith.subf %23, %22 : vector<16x128xf32>
    %25 = math.exp %24 : vector<16x128xf32>
    %26 = math.log1p %25 : vector<16x128xf32>
    %27 = arith.addf %21, %26 : vector<16x128xf32>
    %cst_9 = arith.constant 4.000000e-01 : f32
    %28 = vector.broadcast %cst_9 : f32 to vector<16x128xf32>
    %29 = arith.mulf %28, %27 : vector<16x128xf32>
    %30 = arith.addf %17, %29 : vector<16x128xf32>
    %c0_i32_10 = arith.constant 0 : i32
    %31 = arith.cmpi slt, %1, %c0_i32_10 : i32
    %32 = arith.extui %31 : i1 to i32
    %c0_i32_11 = arith.constant 0 : i32
    %33 = arith.cmpi ne, %32, %c0_i32_11 : i32
    scf.if %33 {
      %c0_16 = arith.constant 0 : index
      %c0_17 = arith.constant 0 : index
      %40 = vector.load %arg6[%c0_16, %c0_17] : memref<16x128xf32, #tpu.memory_space<vmem>>, vector<16x128xf32>
      %41 = arith.addf %40, %30 : vector<16x128xf32>
      %c0_18 = arith.constant 0 : index
      %c0_19 = arith.constant 0 : index
      %42 = vector.load %arg6[%c0_18, %c0_19] : memref<16x128xf32, #tpu.memory_space<vmem>>, vector<16x128xf32>
      tpu.vector_store %arg6[%c0_18, %c0_19], %41 {strides = array<i32>} : memref<16x128xf32, #tpu.memory_space<vmem>>, vector<16x128xf32>,
    } else {
    }
    %c0_i32_12 = arith.constant 0 : i32
    %34 = arith.cmpi eq, %1, %c0_i32_12 : i32
    %35 = arith.extui %34 : i1 to i32
    %c0_i32_13 = arith.constant 0 : i32
    %36 = arith.cmpi ne, %35, %c0_i32_13 : i32
    scf.if %36 {
      %40 = tpu.iota {dimensions = array<i32: 0>} : vector<16x128xi32>
      %41 = tpu.iota {dimensions = array<i32: 1>} : vector<16x128xi32>
      %c128_i32 = arith.constant 128 : i32
      %42 = vector.broadcast %c128_i32 : i32 to vector<16x128xi32>
      %43 = arith.muli %40, %42 : vector<16x128xi32>
      %44 = arith.addi %43, %41 : vector<16x128xi32>
      %c2048_i32 = arith.constant 2048 : i32
      %45 = vector.broadcast %c2048_i32 : i32 to vector<16x128xi32>
      %46 = arith.cmpi slt, %44, %45 : vector<16x128xi32>
      %c0_16 = arith.constant 0 : index
      %c0_17 = arith.constant 0 : index
      %47 = vector.load %arg6[%c0_16, %c0_17] : memref<16x128xf32, #tpu.memory_space<vmem>>, vector<16x128xf32>
      %cst_18 = arith.constant 0.000000e+00 : f32
      %48 = vector.broadcast %cst_18 : f32 to vector<16x128xf32>
      %49 = arith.select %46, %30, %48 : vector<16x128xi1>, vector<16x128xf32>
      %50 = arith.addf %47, %49 : vector<16x128xf32>
      %c0_19 = arith.constant 0 : index
      %c0_20 = arith.constant 0 : index
      %51 = vector.load %arg6[%c0_19, %c0_20] : memref<16x128xf32, #tpu.memory_space<vmem>>, vector<16x128xf32>
      tpu.vector_store %arg6[%c0_19, %c0_20], %50 {strides = array<i32>} : memref<16x128xf32, #tpu.memory_space<vmem>>, vector<16x128xf32>,
    } else {
    }
    %c0_i32_14 = arith.constant 0 : i32
    %37 = arith.cmpi eq, %arg1, %c0_i32_14 : i32
    %38 = arith.extui %37 : i1 to i32
    %c0_i32_15 = arith.constant 0 : i32
    %39 = arith.cmpi ne, %38, %c0_i32_15 : i32
    scf.if %39 {
      %c0_16 = arith.constant 0 : index
      %c0_17 = arith.constant 0 : index
      %40 = vector.load %arg6[%c0_16, %c0_17] : memref<16x128xf32, #tpu.memory_space<vmem>>, vector<16x128xf32>
      %41 = vector.shape_cast %40 : vector<16x128xf32> to vector<2x8x128xf32>
      %cst_18 = arith.constant dense<0.000000e+00> : vector<8x128xf32>
      %42 = vector.multi_reduction <add>, %41, %cst_18 [0] : vector<2x8x128xf32> to vector<8x128xf32>
      %c0_19 = arith.constant 0 : index
      %c0_20 = arith.constant 0 : index
      %43 = vector.load %arg5[%c0_19, %c0_20] : memref<8x128xf32, #tpu.memory_space<vmem>>, vector<8x128xf32>
      tpu.vector_store %arg5[%c0_19, %c0_20], %42 {strides = array<i32>} : memref<8x128xf32, #tpu.memory_space<vmem>>, vector<8x128xf32>,
    } else {
    }
    return
  }
  func.func @transform_0(%arg0: i32, %arg1: i32) -> (i32, i32) {
    %c1_i32 = arith.constant 1 : i32
    %0 = arith.muli %arg0, %c1_i32 : i32
    %1 = arith.addi %0, %arg1 : i32
    %c0_i32 = arith.constant 0 : i32
    %c0_i32_0 = arith.constant 0 : i32
    return %1, %c0_i32 : i32, i32
  }
  func.func @transform_1(%arg0: i32, %arg1: i32) -> (i32, i32) {
    %c1_i32 = arith.constant 1 : i32
    %0 = arith.muli %arg0, %c1_i32 : i32
    %1 = arith.addi %0, %arg1 : i32
    %c0_i32 = arith.constant 0 : i32
    %c0_i32_0 = arith.constant 0 : i32
    return %1, %c0_i32 : i32, i32
  }
  func.func @transform_2(%arg0: i32, %arg1: i32) -> (i32, i32) {
    %c1_i32 = arith.constant 1 : i32
    %0 = arith.muli %arg0, %c1_i32 : i32
    %1 = arith.addi %0, %arg1 : i32
    %c0_i32 = arith.constant 0 : i32
    %c0_i32_0 = arith.constant 0 : i32
    return %1, %c0_i32 : i32, i32
  }
  func.func @transform_3(%arg0: i32, %arg1: i32) -> (i32, i32) {
    %c0_i32 = arith.constant 0 : i32
    %c0_i32_0 = arith.constant 0 : i32
    return %arg0, %c0_i32 : i32, i32
  }
}

</mosaic_0001>

<llo_original>
// kernel: tpu_custom_call.1
$region0: #{tpu_custom_call.1}
  #allocation0 [shape = 'u32[]', space=smem, size = 0x4, offset = 0x4, fixed_abs, tag = 'smem constant byte address 0x4 - core index']
  #allocation1 [shape = 'u32[144,128]{1,0:T(1,128)}', space=vmem, size = 0x12000, scoped, tag = 'internal scratch']
  #allocation2 [shape = 'f32[16,128]{1,0:T(8,128)}', space=vmem, size = 0x2000, scoped, tag = 'scratch operand']
  %s0 = inlined_call_operand.hbm [shape: f32[32,128], index: 0, kind: input, shape index: {}]
  %s1 = inlined_call_operand.hbm [shape: f32[32,128], index: 1, kind: input, shape index: {}]
  %s2 = inlined_call_operand.hbm [shape: f32[32,128], index: 2, kind: input, shape index: {}]
  %s3 = inlined_call_operand.hbm [shape: f32[16,128], index: 3, kind: output, shape index: {}]
  %s4 = sld [smem:[#allocation0]]
  $region73: #{tpu_custom_call.1} parent=0
    _
  %s6 = ssub.s32 1, %s4
  %s7 = scalar_select 0, %s6, %s4
  $region1: #{tpu_custom_call.1} parent=0
    #allocation3 [shape = 'u8[16384]{0}', space=vmem, size = 0x4000, scoped, tag = 'input window, operand 0']
    #allocation4 [shape = 's32[2]{0}', space=sflag, size = 0x8, scoped, tag = 'scoped memory for tpu_custom_call.1']
    #allocation5 [shape = 's32[2]{0}', space=sflag, size = 0x8, scoped, tag = 'scoped memory for tpu_custom_call.1']
    #allocation6 [shape = 'u8[16384]{0}', space=vmem, size = 0x4000, scoped, tag = 'input window, operand 1']
    #allocation7 [shape = 's32[2]{0}', space=sflag, size = 0x8, scoped, tag = 'scoped memory for tpu_custom_call.1']
    #allocation8 [shape = 'u8[16384]{0}', space=vmem, size = 0x4000, scoped, tag = 'input window, operand 2']
    #allocation9 [shape = 'u8[8192]{0}', space=vmem, size = 0x2000, scoped, tag = 'output window, operand 0']
    %8 = vsyncpa [#allocation4], 0
    %s9 = scalar_lea.sflag [#allocation4], 1
    %10 = vsyncpa %s9, 0
    %11 = vsyncpa [#allocation7], 0
    %s12 = scalar_lea.sflag [#allocation7], 1
    %13 = vsyncpa %s12, 0
    %14 = vsyncpa [#allocation5], 0
    %s15 = scalar_lea.sflag [#allocation5], 1
    %16 = vsyncpa %s15, 0
    loop: start=0, step=1, limit=4
    $region2: #{tpu_custom_call.1} parent=1 // loop_pre_header
      _
    $region3: #{tpu_custom_call.1} parent=1 // loop_header
      %s18 = sphi 0, %s22
      %p19 = scmp.ge.s32.totalorder %s18, 4
      %s25 = sphi 0, %s37
      %s26 = sphi 0, %s33
      %s27 = sphi 0, %s25
      %s28 = sphi 0, %s26
      %s29 = sphi 0, %s27
      %s30 = sphi 0, %s28
      %s42 = sphi 0, %s44
      %s45 = sphi 0, %s42
      %s46 = sphi 0, %s45
      %s62 = sphi 0, %s46
      %s70 = sphi 0, %s72
      %s73 = sphi 0, %s70
      %s74 = sphi 0, %s73
      %s90 = sphi 0, %s74
      %s98 = sphi 0, %s100
      %s101 = sphi 0, %s98
      %s102 = sphi 0, %s101
      %s118 = sphi 0, %s102
      %s124 = sphi 0, %s126
      %s127 = sphi 0, %s124
      %s128 = sphi 0, %s127
      %s144 = sphi 0, %s128
    $region4: #{tpu_custom_call.1} parent=1 // loop_header_branch
      %21 = sbr.rel (%p19) target = $region8
    $region5: #{tpu_custom_call.1} parent=1 // loop_body
      %s23 = ssub.s32 %s18, 1
      %s24 = ssub.s32 %s18, 2
      %s31 = sadd.s32 1, %s26
      %p32 = scmp.ge.s32.totalorder %s31, 1
      %s33 = scalar_select %p32, 0, %s31
      %s34 = sadd.s32 1, %s25
      %s35 = scalar_select %p32, %s34, %s25
      %p36 = scmp.ge.s32.totalorder %s35, 2
      %s37 = scalar_select %p36, 0, %s35
      %s38 = sadd.s32 %s25, %s26
      %s39 = sadd.s32 %s37, %s33
      %s40 = ssub.s32 %s38, %s39
      %p41 = scmp.eq.s32.totalorder %s40, 0
      %s43 = sadd.s32 %s42, 1
      %s44 = scalar_select %p41, %s42, %s43
      %p47 = pneg %p41
      %p48 = scmp.eq.s32.totalorder %s18, 1
      %p49 = por %p47, %p48
      %p50 = scmp.ne.s32.totalorder %s42, %s45
      %p51 = scmp.eq.s32.totalorder %s18, 0
      %p52 = por %p50, %p51
      %p53 = scmp.ne.s32.totalorder %s42, %s45
      %p54 = scmp.eq.s32.totalorder %s23, 1
      %p55 = por %p53, %p54
      %p56 = scmp.ne.s32.totalorder %s45, %s46
      %p57 = scmp.eq.s32.totalorder %s23, 0
      %p58 = por %p56, %p57
      %p59 = scmp.ne.s32.totalorder %s45, %s46
      %p60 = scmp.eq.s32.totalorder %s24, 1
      %p61 = por %p59, %p60
      %p63 = scmp.ne.s32.totalorder %s46, %s62
      %p64 = scmp.eq.s32.totalorder %s24, 0
      %p65 = por %p63, %p64
      %s66 = sadd.s32 %s25, %s26
      %s67 = sadd.s32 %s37, %s33
      %s68 = ssub.s32 %s66, %s67
      %p69 = scmp.eq.s32.totalorder %s68, 0
      %s71 = sadd.s32 %s70, 1
      %s72 = scalar_select %p69, %s70, %s71
      %p75 = pneg %p69
      %p76 = scmp.eq.s32.totalorder %s18, 1
      %p77 = por %p75, %p76
      %p78 = scmp.ne.s32.totalorder %s70, %s73
      %p79 = scmp.eq.s32.totalorder %s18, 0
      %p80 = por %p78, %p79
      %p81 = scmp.ne.s32.totalorder %s70, %s73
      %p82 = scmp.eq.s32.totalorder %s23, 1
      %p83 = por %p81, %p82
      %p84 = scmp.ne.s32.totalorder %s73, %s74
      %p85 = scmp.eq.s32.totalorder %s23, 0
      %p86 = por %p84, %p85
      %p87 = scmp.ne.s32.totalorder %s73, %s74
      %p88 = scmp.eq.s32.totalorder %s24, 1
      %p89 = por %p87, %p88
      %p91 = scmp.ne.s32.totalorder %s74, %s90
      %p92 = scmp.eq.s32.totalorder %s24, 0
      %p93 = por %p91, %p92
      %s94 = sadd.s32 %s25, %s26
      %s95 = sadd.s32 %s37, %s33
      %s96 = ssub.s32 %s94, %s95
      %p97 = scmp.eq.s32.totalorder %s96, 0
      %s99 = sadd.s32 %s98, 1
      %s100 = scalar_select %p97, %s98, %s99
      %p103 = pneg %p97
      %p104 = scmp.eq.s32.totalorder %s18, 1
      %p105 = por %p103, %p104
      %p106 = scmp.ne.s32.totalorder %s98, %s101
      %p107 = scmp.eq.s32.totalorder %s18, 0
      %p108 = por %p106, %p107
      %p109 = scmp.ne.s32.totalorder %s98, %s101
      %p110 = scmp.eq.s32.totalorder %s23, 1
      %p111 = por %p109, %p110
      %p112 = scmp.ne.s32.totalorder %s101, %s102
      %p113 = scmp.eq.s32.totalorder %s23, 0
      %p114 = por %p112, %p113
      %p115 = scmp.ne.s32.totalorder %s101, %s102
      %p116 = scmp.eq.s32.totalorder %s24, 1
      %p117 = por %p115, %p116
      %p119 = scmp.ne.s32.totalorder %s102, %s118
      %p120 = scmp.eq.s32.totalorder %s24, 0
      %p121 = por %p119, %p120
      %s122 = ssub.s32 %s25, %s37
      %p123 = scmp.eq.s32.totalorder %s122, 0
      %s125 = sadd.s32 %s124, 1
      %s126 = scalar_select %p123, %s124, %s125
      %p129 = pneg %p123
      %p130 = scmp.eq.s32.totalorder %s18, 1
      %p131 = por %p129, %p130
      %p132 = scmp.ne.s32.totalorder %s124, %s127
      %p133 = scmp.eq.s32.totalorder %s18, 0
      %p134 = por %p132, %p133
      %p135 = scmp.ne.s32.totalorder %s124, %s127
      %p136 = scmp.eq.s32.totalorder %s23, 1
      %p137 = por %p135, %p136
      %p138 = scmp.ne.s32.totalorder %s127, %s128
      %p139 = scmp.eq.s32.totalorder %s23, 0
      %p140 = por %p138, %p139
      %p141 = scmp.ne.s32.totalorder %s127, %s128
      %p142 = scmp.eq.s32.totalorder %s24, 1
      %p143 = por %p141, %p142
      %p145 = scmp.ne.s32.totalorder %s128, %s144
      %p146 = scmp.eq.s32.totalorder %s24, 0
      %p147 = por %p145, %p146
      %p148 = scmp.le.s32.totalorder 1, %s18
      %p149 = scmp.lt.s32.totalorder %s18, 3
      %p150 = pnand %p148, %p149
      %p151 = pneg %p150
      // Predicated region
      $region9: #{tpu_custom_call.1} parent=5 // pred_check
        _
      $region10: #{tpu_custom_call.1} parent=5 // pred_check_branch
        %153 = sbr.rel (%p150) target = $region12
      $region11: #{tpu_custom_call.1} parent=5 // pred_region
        %s154 = ssub.s32 %s18, 1
      $region12: #{tpu_custom_call.1} parent=5 // pred_fallthru
        _
      %p155 = scmp.lt.s32.totalorder %s18, 2
      // Predicated region
      $region13: #{tpu_custom_call.1} parent=5 // pred_check
        %p156 = pneg %p155
      $region14: #{tpu_custom_call.1} parent=5 // pred_check_branch
        %158 = sbr.rel (%p156) target = $region16
      $region15: #{tpu_custom_call.1} parent=5 // pred_region
        // Predicated region
        $region17: #{tpu_custom_call.1} parent=15 // pred_check
          %p159 = pneg %p52
        $region18: #{tpu_custom_call.1} parent=15 // pred_check_branch
          %161 = sbr.rel (%p159) target = $region20
        $region19: #{tpu_custom_call.1} parent=15 // pred_region
          %s162 = sand.u32 %s42, 1
          %s163 = scalar_lea.sflag [#allocation4], %s162
          %s164 = sand.u32 %s42, 1
          %s165 = smul.addr %s164, 16
          %s166 = scalar_lea.vmem [#allocation3], %s165
          %s167 = sadd.s32 %s25, %s26
          %s168 = smul.u32 2, %s167
          %s170 = ssub.s32 256, 256
          %171 = vsyncadd %s163, %s170
          %s172 = smul.addr %s168, 128
          %s173 = scalar_lea.hbm %s0, %s172
          %s174 = sshll.u32 %s166, 4
          %s175 = int_to_ptr.vmem [resolvable:$true] %s174
          %180 = dma.hbm_to_vmem [thread:$0]  %s173, 256, %s175, %s163, 128, 128, 8
        $region20: #{tpu_custom_call.1} parent=15 // pred_fallthru
          _
        // Predicated region
        $region21: #{tpu_custom_call.1} parent=15 // pred_check
          %p181 = pneg %p80
        $region22: #{tpu_custom_call.1} parent=15 // pred_check_branch
          %183 = sbr.rel (%p181) target = $region24
        $region23: #{tpu_custom_call.1} parent=15 // pred_region
          %s184 = sand.u32 %s18, 1
          %s185 = scalar_lea.sflag [#allocation7], %s184
          %s186 = sand.u32 %s70, 1
          %s187 = smul.addr %s186, 16
          %s188 = scalar_lea.vmem [#allocation6], %s187
          %s189 = sadd.s32 %s25, %s26
          %s190 = smul.u32 2, %s189
          %s192 = ssub.s32 256, 256
          %193 = vsyncadd %s185, %s192
          %s194 = smul.addr %s190, 128
          %s195 = scalar_lea.hbm %s1, %s194
          %s196 = sshll.u32 %s188, 4
          %s197 = int_to_ptr.vmem [resolvable:$true] %s196
          %202 = dma.hbm_to_vmem [thread:$0]  %s195, 256, %s197, %s185, 128, 128, 8
        $region24: #{tpu_custom_call.1} parent=15 // pred_fallthru
          _
        // Predicated region
        $region25: #{tpu_custom_call.1} parent=15 // pred_check
          %p203 = pneg %p108
        $region26: #{tpu_custom_call.1} parent=15 // pred_check_branch
          %205 = sbr.rel (%p203) target = $region28
        $region27: #{tpu_custom_call.1} parent=15 // pred_region
          %s206 = sand.u32 %s18, 1
          %s207 = scalar_lea.sflag [#allocation7], %s206
          %s208 = sand.u32 %s98, 1
          %s209 = smul.addr %s208, 16
          %s210 = scalar_lea.vmem [#allocation8], %s209
          %s211 = sadd.s32 %s25, %s26
          %s212 = smul.u32 2, %s211
          %s214 = ssub.s32 256, 256
          %215 = vsyncadd %s207, %s214
          %s216 = smul.addr %s212, 128
          %s217 = scalar_lea.hbm %s2, %s216
          %s218 = sshll.u32 %s210, 4
          %s219 = int_to_ptr.vmem [resolvable:$true] %s218
          %224 = dma.hbm_to_vmem [thread:$0]  %s217, 256, %s219, %s207, 128, 128, 8
        $region28: #{tpu_custom_call.1} parent=15 // pred_fallthru
          _
      $region16: #{tpu_custom_call.1} parent=5 // pred_fallthru
        _
      %p225 = scmp.le.s32.totalorder 1, %s18
      %p226 = scmp.lt.s32.totalorder %s18, 3
      %p227 = pnand %p225, %p226
      %p228 = pneg %p227
      // Predicated region
      $region29: #{tpu_custom_call.1} parent=5 // pred_check
        _
      $region30: #{tpu_custom_call.1} parent=5 // pred_check_branch
        %230 = sbr.rel (%p227) target = $region32
      $region31: #{tpu_custom_call.1} parent=5 // pred_region
        %s231 = ssub.s32 %s18, 1
        %s232 = sand.u32 %s45, 1
        %s233 = scalar_lea.sflag [#allocation4], %s232
        %s234 = sand.u32 %s45, 1
        %s235 = smul.addr %s234, 16
        %s236 = scalar_lea.vmem [#allocation3], %s235
        // Predicated region
        $region33: #{tpu_custom_call.1} parent=31 // pred_check
          %p237 = pneg %p58
        $region34: #{tpu_custom_call.1} parent=31 // pred_check_branch
          %239 = sbr.rel (%p237) target = $region36
        $region35: #{tpu_custom_call.1} parent=31 // pred_region
          %240 = dma.done %s233, 256
        $region36: #{tpu_custom_call.1} parent=31 // pred_fallthru
          _
        %s241 = sand.u32 %s23, 1
        %s242 = scalar_lea.sflag [#allocation7], %s241
        %s243 = sand.u32 %s73, 1
        %s244 = smul.addr %s243, 16
        %s245 = scalar_lea.vmem [#allocation6], %s244
        // Predicated region
        $region37: #{tpu_custom_call.1} parent=31 // pred_check
          %p246 = pneg %p86
        $region38: #{tpu_custom_call.1} parent=31 // pred_check_branch
          %248 = sbr.rel (%p246) target = $region40
        $region39: #{tpu_custom_call.1} parent=31 // pred_region
          %249 = dma.done %s242, 256
        $region40: #{tpu_custom_call.1} parent=31 // pred_fallthru
          _
        %s250 = sand.u32 %s23, 1
        %s251 = scalar_lea.sflag [#allocation7], %s250
        %s252 = sand.u32 %s101, 1
        %s253 = smul.addr %s252, 16
        %s254 = scalar_lea.vmem [#allocation8], %s253
        // Predicated region
        $region41: #{tpu_custom_call.1} parent=31 // pred_check
          %p255 = pneg %p114
        $region42: #{tpu_custom_call.1} parent=31 // pred_check_branch
          %257 = sbr.rel (%p255) target = $region44
        $region43: #{tpu_custom_call.1} parent=31 // pred_region
          %258 = dma.done %s251, 256
        $region44: #{tpu_custom_call.1} parent=31 // pred_fallthru
          _
        %s259 = sand.u32 %s45, 1
        %s260 = scalar_lea.sflag [#allocation4], %s259
        %s261 = sand.u32 %s45, 1
        %s262 = smul.addr %s261, 16
        %s263 = scalar_lea.vmem [#allocation3], %s262
        %p264 = pneg %p58
        %p265 = pneg %p55
        %s266 = sand.u32 %s23, 1
        %s267 = scalar_lea.sflag [#allocation7], %s266
        %s268 = sand.u32 %s73, 1
        %s269 = smul.addr %s268, 16
        %s270 = scalar_lea.vmem [#allocation6], %s269
        %p271 = pneg %p86
        %p272 = pneg %p83
        %s273 = sand.u32 %s23, 1
        %s274 = scalar_lea.sflag [#allocation7], %s273
        %s275 = sand.u32 %s101, 1
        %s276 = smul.addr %s275, 16
        %s277 = scalar_lea.vmem [#allocation8], %s276
        %p278 = pneg %p114
        %p279 = pneg %p111
        %p280 = pneg %p140
        %p281 = pneg %p137
        %s282 = sand.u32 %s127, 1
        %s283 = scalar_lea.sflag [#allocation5], %s282
        %s284 = sand.u32 %s127, 1
        %s285 = smul.addr %s284, 8
        %s286 = scalar_lea.vmem [#allocation9], %s285
        %s287 = sadd.s32 %s27, %s28
        %s288 = smul.u32 2, %s287
        %s289 = sadd.s32 %s27, %s28
        %s290 = smul.u32 2, %s289
        %s291 = sadd.s32 %s27, %s28
        %s292 = smul.u32 2, %s291
        %s293 = sadd.s32 %s27, %s28
        %p294 = scmp.eq.s32.totalorder %s28, 0
        // Predicated region
        $region45: #{tpu_custom_call.1} parent=31 // pred_check
          %p295 = pneg %p294
        $region46: #{tpu_custom_call.1} parent=31 // pred_check_branch
          %297 = sbr.rel (%p295) target = $region48
        $region47: #{tpu_custom_call.1} parent=31 // pred_region
          %298 = vst [vmem:[#allocation2] sm:$0xff] 0.0
          %299 = vst [vmem:[#allocation2 + $0x8] sm:$0xff] 0.0
        $region48: #{tpu_custom_call.1} parent=31 // pred_fallthru
          _
        %v300 = vld [vmem:[%s236] sm:$0xff]
        %v301 = vld [vmem:[%s236 + $0x8] sm:$0xff]
        %v302 = vld [vmem:[%s245] sm:$0xff]
        %v303 = vld [vmem:[%s245 + $0x8] sm:$0xff]
        %v304 = vld [vmem:[%s254] sm:$0xff]
        %v305 = vld [vmem:[%s254 + $0x8] sm:$0xff]
        %v306 = vmax.f32 %v300, 0.0
        %v307 = vmax.f32 %v301, 0.0
        %v308 = vmul.f32 %v300, %v304
        %v309 = vmul.f32 %v301, %v305
        %v310 = vsub.f32 %v306, %v308
        %v311 = vsub.f32 %v307, %v309
        %v312 = vand.u32 2147483647, %v300
        %v313 = vand.u32 2147483647, %v301
        %v314 = vsub.f32 0.0, %v312
        %v315 = vsub.f32 0.0, %v313
        %v316 = vmul.f32 %v314, 1.442695
        %v317 = vpow.pop %v316
        %v318 = vmul.f32 %v315, 1.442695
        %v319 = vpow.pop %v318
        %v320 = vadd.f32 %v317, 1.0
        %v321 = vlog2.pop %v320
        %v322 = vmul.f32 %v321, 0.6931472
        %v323 = vmul.f32 -0.5, %v317
        %v324 = vadd.f32 %v323, 1.0
        %v325 = vmul.f32 %v324, %v317
        %v326 = vand.u32 2147483647, %v317
        %vm327 = vcmp.lt.f32.partialorder %v326, 0.0004427343
        %v328 = vsel %vm327, %v325, %v322
        %v329 = vadd.f32 %v319, 1.0
        %v330 = vlog2.pop %v329
        %v331 = vmul.f32 %v330, 0.6931472
        %v332 = vmul.f32 -0.5, %v319
        %v333 = vadd.f32 %v332, 1.0
        %v334 = vmul.f32 %v333, %v319
        %v335 = vand.u32 2147483647, %v319
        %vm336 = vcmp.lt.f32.partialorder %v335, 0.0004427343
        %v337 = vsel %vm336, %v334, %v331
        %v338 = vadd.f32 %v310, %v328
        %v339 = vadd.f32 %v311, %v337
        %v340 = vmax.f32 %v302, 0.0
        %v341 = vmax.f32 %v303, 0.0
        %v342 = vmul.f32 %v302, %v304
        %v343 = vmul.f32 %v303, %v305
        %v344 = vsub.f32 %v340, %v342
        %v345 = vsub.f32 %v341, %v343
        %v346 = vand.u32 2147483647, %v302
        %v347 = vand.u32 2147483647, %v303
        %v348 = vsub.f32 0.0, %v346
        %v349 = vsub.f32 0.0, %v347
        %v350 = vmul.f32 %v348, 1.442695
        %v351 = vpow.pop %v350
        %v352 = vmul.f32 %v349, 1.442695
        %v353 = vpow.pop %v352
        %v354 = vadd.f32 %v351, 1.0
        %v355 = vlog2.pop %v354
        %v356 = vmul.f32 %v355, 0.6931472
        %v357 = vmul.f32 -0.5, %v351
        %v358 = vadd.f32 %v357, 1.0
        %v359 = vmul.f32 %v358, %v351
        %v360 = vand.u32 2147483647, %v351
        %vm361 = vcmp.lt.f32.partialorder %v360, 0.0004427343
        %v362 = vsel %vm361, %v359, %v356
        %v363 = vadd.f32 %v353, 1.0
        %v364 = vlog2.pop %v363
        %v365 = vmul.f32 %v364, 0.6931472
        %v366 = vmul.f32 -0.5, %v353
        %v367 = vadd.f32 %v366, 1.0
        %v368 = vmul.f32 %v367, %v353
        %v369 = vand.u32 2147483647, %v353
        %vm370 = vcmp.lt.f32.partialorder %v369, 0.0004427343
        %v371 = vsel %vm370, %v368, %v365
        %v372 = vadd.f32 %v344, %v362
        %v373 = vadd.f32 %v345, %v371
        %v374 = vmul.f32 %v372, 0.4
        %v375 = vmul.f32 %v373, 0.4
        %v376 = vadd.f32 %v338, %v374
        %v377 = vadd.f32 %v339, %v375
        %p378 = scmp.lt.s32.totalorder %s293, 0
        // Predicated region
        $region49: #{tpu_custom_call.1} parent=31 // pred_check
          %p379 = pneg %p378
        $region50: #{tpu_custom_call.1} parent=31 // pred_check_branch
          %381 = sbr.rel (%p379) target = $region52
        $region51: #{tpu_custom_call.1} parent=31 // pred_region
          %v382 = vld [vmem:[#allocation2] sm:$0xff]
          %v383 = vld [vmem:[#allocation2 + $0x8] sm:$0xff]
          %v384 = vadd.f32 %v382, %v376
          %v385 = vadd.f32 %v383, %v377
          %386 = vst [vmem:[#allocation2] sm:$0xff] %v384
          %387 = vst [vmem:[#allocation2 + $0x8] sm:$0xff] %v385
        $region52: #{tpu_custom_call.1} parent=31 // pred_fallthru
          _
        %p388 = scmp.eq.s32.totalorder %s293, 0
        // Predicated region
        $region53: #{tpu_custom_call.1} parent=31 // pred_check
          %p389 = pneg %p388
        $region54: #{tpu_custom_call.1} parent=31 // pred_check_branch
          %391 = sbr.rel (%p389) target = $region56
        $region55: #{tpu_custom_call.1} parent=31 // pred_region
          %v392 = vlaneseq
          %v393 = vshrl.u32 %v392, 7
          %v394 = vadd.s32 %v393, 8
          %v395 = vlaneseq
          %v396 = vand.u32 %v395, 127
          %v397 = vmul.u32 %v393, 128
          %v398 = vmul.u32 %v394, 128
          %v399 = vadd.s32 %v397, %v396
          %v400 = vadd.s32 %v398, %v396
          %vm401 = vcmp.lt.s32.totalorder %v399, 2048
          %vm402 = vcmp.lt.s32.totalorder %v400, 2048
          %v403 = vld [vmem:[#allocation2] sm:$0xff]
          %v404 = vld [vmem:[#allocation2 + $0x8] sm:$0xff]
          %v405 = vsel %vm401, %v376, 0.0
          %v406 = vsel %vm402, %v377, 0.0
          %v407 = vadd.f32 %v403, %v405
          %v408 = vadd.f32 %v404, %v406
          %409 = vst [vmem:[#allocation2] sm:$0xff] %v407
          %410 = vst [vmem:[#allocation2 + $0x8] sm:$0xff] %v408
        $region56: #{tpu_custom_call.1} parent=31 // pred_fallthru
          _
        // Predicated region
        $region57: #{tpu_custom_call.1} parent=31 // pred_check
          %p411 = pneg %p294
        $region58: #{tpu_custom_call.1} parent=31 // pred_check_branch
          %413 = sbr.rel (%p411) target = $region60
        $region59: #{tpu_custom_call.1} parent=31 // pred_region
          %v414 = vld [vmem:[#allocation2] sm:$0xff]
          %v415 = vld [vmem:[#allocation2 + $0x8] sm:$0xff]
          %v416 = vadd.f32 %v414, %v415
          %417 = vst [vmem:[%s286] sm:$0xff] %v416
        $region60: #{tpu_custom_call.1} parent=31 // pred_fallthru
          _
        %s418 = sand.u32 %s127, 1
        %s419 = scalar_lea.sflag [#allocation5], %s418
        %s420 = sand.u32 %s127, 1
        %s421 = smul.addr %s420, 8
        %s422 = scalar_lea.vmem [#allocation9], %s421
        // Predicated region
        $region61: #{tpu_custom_call.1} parent=31 // pred_check
          %p423 = pneg %p137
        $region62: #{tpu_custom_call.1} parent=31 // pred_check_branch
          %425 = sbr.rel (%p423) target = $region64
        $region63: #{tpu_custom_call.1} parent=31 // pred_region
          %s427 = ssub.s32 128, 128
          %428 = vsyncadd %s419, %s427
          %s429 = smul.addr %s27, 128
          %s430 = scalar_lea.hbm %s3, %s429
          %s432 = sshll.u32 %s422, 4
          %s433 = int_to_ptr.vmem [resolvable:$true] %s432
          %435 = dma.vmem_to_hbm [thread:$0]  %s433, 128, %s430, %s419
        $region64: #{tpu_custom_call.1} parent=31 // pred_fallthru
          _
      $region32: #{tpu_custom_call.1} parent=5 // pred_fallthru
        _
      %p436 = scmp.le.s32.totalorder 2, %s18
      // Predicated region
      $region65: #{tpu_custom_call.1} parent=5 // pred_check
        %p437 = pneg %p436
      $region66: #{tpu_custom_call.1} parent=5 // pred_check_branch
        %439 = sbr.rel (%p437) target = $region68
      $region67: #{tpu_custom_call.1} parent=5 // pred_region
        %s440 = ssub.s32 %s18, 2
        // Predicated region
        $region69: #{tpu_custom_call.1} parent=67 // pred_check
          %p441 = pneg %p143
        $region70: #{tpu_custom_call.1} parent=67 // pred_check_branch
          %443 = sbr.rel (%p441) target = $region72
        $region71: #{tpu_custom_call.1} parent=67 // pred_region
          %s444 = sand.u32 %s128, 1
          %s445 = scalar_lea.sflag [#allocation5], %s444
          %s446 = sand.u32 %s128, 1
          %s447 = smul.addr %s446, 8
          %s448 = scalar_lea.vmem [#allocation9], %s447
          %449 = dma.done %s445, 128
        $region72: #{tpu_custom_call.1} parent=67 // pred_fallthru
          _
      $region68: #{tpu_custom_call.1} parent=5 // pred_fallthru
        _
    $region6: #{tpu_custom_call.1} parent=1 // loop_footer
      %s22 = sadd.s32 1, %s18
    $region7: #{tpu_custom_call.1} parent=1 // loop_footer_branch
      %17 = sbr.rel target = $region3
    $region8: #{tpu_custom_call.1} parent=1 // loop_exit
      _
    %450 = vsyncpa [#allocation4], 1
    %s451 = scalar_lea.sflag [#allocation4], 1
    %452 = vsyncpa %s451, 1
    %453 = vsyncpa [#allocation7], 1
    %s454 = scalar_lea.sflag [#allocation7], 1
    %455 = vsyncpa %s454, 1
    %456 = vsyncpa [#allocation5], 1
    %s457 = scalar_lea.sflag [#allocation5], 1
    %458 = vsyncpa %s457, 1

</llo_original>
